<compile_context>
chip_gen: v5e
topology: v5e:2x2
jax: 0.10.0
libtpu: 0.0.40
codegen_flags: <defaults>
</compile_context>

<pallas_src>
import functools

import jax
import jax.numpy as jnp
from jax import lax
from jax.experimental import pallas as pl
from jax.experimental.pallas import tpu as pltpu

_LANES = 128
_ACC_ROWS = 32          # 4 f32 vregs of partial sums per split (reduce ILP)
_ROW_QUANTUM = 32       # tile_rows multiple: covers f32(8)/bf16(16)/int8(32) packing
_CLAMP_MIN = 1e-8


def _cdiv(a, b):
    return -(-a // b)


def _l1_kernel(x_ref, o_ref, *, total_elems, tile_rows, steps_per_split,
               n_tiles, needs_mask):
    c = pl.program_id(0)      # TensorCore split (parallel / core_parallel)
    i = pl.program_id(1)      # reduction steps within the split (arbitrary)

    @pl.when(i == 0)
    def _init():
        o_ref[...] = jnp.zeros_like(o_ref)

    xc = jnp.maximum(x_ref[...].astype(jnp.float32), _CLAMP_MIN)

    def _accumulate(vals):
        # Consecutive (_ACC_ROWS, 128) chunks are whole f32 vregs; summing
        # along axis 0 is a tree of independent VPU adds into 4 accumulator
        # vregs (no single long serial vadd chain, no XLU work per step).
        o_ref[...] += vals.reshape(tile_rows // _ACC_ROWS, _ACC_ROWS,
                                   _LANES).sum(axis=0)

    if needs_mask:
        # Only the globally-last tile can contain lane-pad zeros (clamp would
        # turn each into 1e-8) or rows past the logical end of the input
        # (stale partial-block data).  Gate the mask so the hot loop is
        # completely mask-free.
        step = c * steps_per_split + i
        is_last = step == n_tiles - 1

        @pl.when(is_last)
        def _tail():
            row = lax.broadcasted_iota(jnp.int32, (tile_rows, _LANES), 0)
            col = lax.broadcasted_iota(jnp.int32, (tile_rows, _LANES), 1)
            flat = row * _LANES + col
            remaining = total_elems - step * (tile_rows * _LANES)
            _accumulate(jnp.where(flat < remaining, xc, 0.0))

        @pl.when(jnp.logical_not(is_last))
        def _body():
            _accumulate(xc)
    else:
        _accumulate(xc)


def _prefer_core_parallel():
    """True on multi-TensorCore chips (v7x-class); False on v5e/v6e."""
    try:
        kind = jax.devices()[0].device_kind.lower()
    except Exception:
        return False
    return ("v7" in kind) or ("7x" in kind)


def l1_distance_loss(x, *, target_tile_bytes=4 * 1024 * 1024, max_splits=2,
                     fast_path_elems=16384, core_parallel=None):
    """x: (batch_size, n_shapelets) -> scalar float32 loss."""
    batch_size, n_shapelets = x.shape
    total = batch_size * n_shapelets
    if total >= 2 ** 31:
        raise ValueError("l1_distance_loss: int32 index math requires fewer "
                         f"than 2**31 elements, got {total}")

    # Fast path: tiny inputs are cheaper as one fused XLA reduction than a
    # kernel launch + grid + (possible) pad copy.
    if total < max(fast_path_elems, _LANES * _ROW_QUANTUM):
        xc = jnp.maximum(x.astype(jnp.float32), _CLAMP_MIN)
        return jnp.sum(xc) / jnp.float32(batch_size)

    itemsize = jnp.dtype(x.dtype).itemsize

    # Lane-dense layout: (rows, 128).  No data copy when total % 128 == 0.
    rows = _cdiv(total, _LANES)
    lane_pad = rows * _LANES - total
    x_flat = x.reshape(-1)
    if lane_pad > 0:
        x_flat = jnp.pad(x_flat, (0, lane_pad))   # only the <128-elem lane tail
    x2d = x_flat.reshape(rows, _LANES)

    # Constant-byte tiles (dtype-independent DMA granularity), multiple of
    # _ROW_QUANTUM rows, never larger than the array: the ragged tail is
    # handled by the gated in-kernel mask instead of padding rows to a tile.
    target_rows = max(_ROW_QUANTUM, target_tile_bytes // (_LANES * itemsize))
    tile_rows = min(target_rows, (rows // _ROW_QUANTUM) * _ROW_QUANTUM)
    tile_rows = max(_ROW_QUANTUM, (tile_rows // _ROW_QUANTUM) * _ROW_QUANTUM)

    n_tiles = _cdiv(rows, tile_rows)
    # Split the reduction across TensorCores only when the split divides the
    # tile count evenly (never create fully out-of-bounds phantom blocks).
    num_splits = (max_splits
                  if (n_tiles >= 2 * max_splits and n_tiles % max_splits == 0)
                  else 1)
    steps_per_split = n_tiles // num_splits

    needs_mask = (lane_pad > 0) or (rows % tile_rows != 0)

    kernel = functools.partial(
        _l1_kernel,
        total_elems=total,
        tile_rows=tile_rows,
        steps_per_split=steps_per_split,
        n_tiles=n_tiles,
        needs_mask=needs_mask,
    )

    if core_parallel is None:
        core_parallel = _prefer_core_parallel()
    lead_sem = (pltpu.CORE_PARALLEL
                if (core_parallel and num_splits > 1) else pltpu.PARALLEL)

    out_rows = num_splits * _ACC_ROWS
    partials = pl.pallas_call(
        kernel,
        out_shape=jax.ShapeDtypeStruct((out_rows, _LANES), jnp.float32),
        grid_spec=pltpu.PrefetchScalarGridSpec(
            num_scalar_prefetch=0,
            grid=(num_splits, steps_per_split),
            in_specs=[
                pl.BlockSpec((tile_rows, _LANES),
                             lambda c, i: (c * steps_per_split + i, 0)),
            ],
            # Same output block across the reduction axis -> stays resident
            # in VMEM and doubles as the per-split accumulator (4 f32 vregs).
            out_specs=pl.BlockSpec((_ACC_ROWS, _LANES), lambda c, i: (c, 0)),
        ),
        compiler_params=pltpu.CompilerParams(
            dimension_semantics=(lead_sem, pltpu.ARBITRARY),
            vmem_limit_bytes=32 * 1024 * 1024,
        ),
        cost_estimate=pl.CostEstimate(
            flops=2 * total,
            transcendentals=0,
            bytes_accessed=total * itemsize + out_rows * _LANES * 4,
        ),
    )(x2d)

    # Tiny final reduction (<= 2 * 32 * 128 f32) + mean over batch.
    return jnp.sum(partials) / jnp.float32(batch_size)


def _reference(x):
    xc = jnp.maximum(x.astype(jnp.float32), _CLAMP_MIN)
    return jnp.mean(jnp.sum(xc, axis=1))


if __name__ == "__main__":
    key = jax.random.PRNGKey(0)
    cases = [
        # (name, shape, kwargs)
        ("tiny / fast-path", (16, 32), {}),
        ("aligned single tile", (96, 512), {}),
        ("ragged rows + lane pad", (300, 77), {}),
        ("multi-tile, two splits", (512, 256), dict(target_tile_bytes=64 * 1024)),
    ]
    for name, shape, kwargs in cases:
        key, sub = jax.random.split(key)
        x = jax.random.normal(sub, shape, dtype=jnp.float32)
        loss = l1_distance_loss(x, **kwargs)
        jax.block_until_ready(loss)
        ref = _reference(x)
        assert jnp.allclose(loss, ref, rtol=1e-5, atol=1e-6), (name, loss, ref)
    print("KERNEL_OK")
</pallas_src>

<mosaic_0001>
module attributes {stable_mosaic.version = 11 : i64} {
  func.func @_l1_kernel(%arg0: i32, %arg1: i32, %arg2: memref<384x128xf32, #tpu.memory_space<vmem>>, %arg3: memref<32x128xf32, #tpu.memory_space<vmem>>) attributes {dimension_semantics = [#tpu.dimension_semantics<parallel>, #tpu.dimension_semantics<arbitrary>], iteration_bounds = array<i64: 1, 1>, scalar_prefetch = 0 : i64, scratch_operands = 0 : i64, tpu.core_type = #tpu.core_type<tc>, window_params = [{transform_indices = @transform_0, window_bounds = array<i64: 384, 128>}, {transform_indices = @transform_1, window_bounds = array<i64: 32, 128>}]} {
    %c0_i32 = arith.constant 0 : i32
    %0 = arith.cmpi eq, %arg1, %c0_i32 : i32
    %1 = arith.extui %0 : i1 to i32
    %c0_i32_0 = arith.constant 0 : i32
    %2 = arith.cmpi ne, %1, %c0_i32_0 : i32
    scf.if %2 {
      %cst_7 = arith.constant 0.000000e+00 : f32
      %11 = vector.broadcast %cst_7 : f32 to vector<32x128xf32>
      %c0_8 = arith.constant 0 : index
      %c0_9 = arith.constant 0 : index
      %12 = vector.load %arg3[%c0_8, %c0_9] : memref<32x128xf32, #tpu.memory_space<vmem>>, vector<32x128xf32>
      tpu.vector_store %arg3[%c0_8, %c0_9], %11 {strides = array<i32>} : memref<32x128xf32, #tpu.memory_space<vmem>>, vector<32x128xf32>,
    } else {
    }
    %c0 = arith.constant 0 : index
    %c0_1 = arith.constant 0 : index
    %3 = vector.load %arg2[%c0, %c0_1] : memref<384x128xf32, #tpu.memory_space<vmem>>, vector<384x128xf32>
    %cst = arith.constant 9.99999993E-9 : f32
    %4 = vector.broadcast %cst : f32 to vector<384x128xf32>
    %5 = arith.maximumf %3, %4 : vector<384x128xf32>
    %c0_2 = arith.constant 0 : index
    %c0_3 = arith.constant 0 : index
    %6 = vector.load %arg3[%c0_2, %c0_3] : memref<32x128xf32, #tpu.memory_space<vmem>>, vector<32x128xf32>
    %7 = vector.shape_cast %5 : vector<384x128xf32> to vector<12x32x128xf32>
    %cst_4 = arith.constant dense<0.000000e+00> : vector<32x128xf32>
    %8 = vector.multi_reduction <add>, %7, %cst_4 [0] : vector<12x32x128xf32> to vector<32x128xf32>
    %9 = arith.addf %6, %8 : vector<32x128xf32>
    %c0_5 = arith.constant 0 : index
    %c0_6 = arith.constant 0 : index
    %10 = vector.load %arg3[%c0_5, %c0_6] : memref<32x128xf32, #tpu.memory_space<vmem>>, vector<32x128xf32>
    tpu.vector_store %arg3[%c0_5, %c0_6], %9 {strides = array<i32>} : memref<32x128xf32, #tpu.memory_space<vmem>>, vector<32x128xf32>,
    return
  }
  func.func @transform_0(%arg0: i32, %arg1: i32) -> (i32, i32) {
    %c1_i32 = arith.constant 1 : i32
    %0 = arith.muli %arg0, %c1_i32 : i32
    %1 = arith.addi %0, %arg1 : i32
    %c0_i32 = arith.constant 0 : i32
    %c0_i32_0 = arith.constant 0 : i32
    return %1, %c0_i32 : i32, i32
  }
  func.func @transform_1(%arg0: i32, %arg1: i32) -> (i32, i32) {
    %c0_i32 = arith.constant 0 : i32
    %c0_i32_0 = arith.constant 0 : i32
    return %arg0, %c0_i32 : i32, i32
  }
}

</mosaic_0001>

<llo_original>
// kernel: tpu_custom_call.1
$region0: #{tpu_custom_call.1}
  #allocation0 [shape = 'u32[]', space=smem, size = 0x4, offset = 0x4, fixed_abs, tag = 'smem constant byte address 0x4 - core index']
  #allocation1 [shape = 'u32[72,128]{1,0:T(1,128)}', space=vmem, size = 0x9000, scoped, tag = 'internal scratch']
  %s0 = inlined_call_operand.hbm [shape: f32[384,128], index: 0, kind: input, shape index: {}]
  %s1 = inlined_call_operand.hbm [shape: f32[32,128], index: 1, kind: output, shape index: {}]
  %s2 = sld [smem:[#allocation0]]
  $region22: #{tpu_custom_call.1} parent=0
    _
  %s4 = ssub.s32 1, %s2
  %s5 = scalar_select 0, %s4, %s2
  $region1: #{tpu_custom_call.1} parent=0
    #allocation2 [shape = 'u8[196608]{0}', space=vmem, size = 0x30000, scoped, tag = 'input window, operand 0, single buffered']
    #allocation3 [shape = 's32[1]{0}', space=sflag, size = 0x4, scoped, tag = 'scoped memory for tpu_custom_call.1']
    #allocation4 [shape = 's32[1]{0}', space=sflag, size = 0x4, scoped, tag = 'scoped memory for tpu_custom_call.1']
    #allocation5 [shape = 'u8[16384]{0}', space=vmem, size = 0x4000, scoped, tag = 'output window, operand 0, single buffered']
    %6 = vsyncpa [#allocation3], 0
    %7 = vsyncpa [#allocation4], 0
    // Predicated region
    $region2: #{tpu_custom_call.1} parent=1 // pred_check
      _
    $region3: #{tpu_custom_call.1} parent=1 // pred_check_branch
      %9 = sbr.rel (0) target = $region5
    $region4: #{tpu_custom_call.1} parent=1 // pred_region
      %s10 = sadd.s32 0, 0
      %s11 = smul.u32 48, %s10
      %13 = vsyncadd [#allocation3], 0
      %s14 = smul.addr %s11, 8
      %s15 = scalar_lea.hbm %s0, %s14
      %s16 = sshll.u32 %s15, 4
      %s17 = int_to_ptr.hbm [resolvable:$true] %s16
      %s18 = sshll.u32 [#allocation2], 4
      %s19 = int_to_ptr.vmem [resolvable:$true] %s18
      %24 = dma.hbm_to_vmem [thread:$0]  %s17, 6144, %s19, [#allocation3], 128, 128, 8
    $region5: #{tpu_custom_call.1} parent=1 // pred_fallthru
      _
    // Predicated region
    $region6: #{tpu_custom_call.1} parent=1 // pred_check
      _
    $region7: #{tpu_custom_call.1} parent=1 // pred_check_branch
      %26 = sbr.rel (0) target = $region9
    $region8: #{tpu_custom_call.1} parent=1 // pred_region
      %28 = dma.done [#allocation3], 6144
    $region9: #{tpu_custom_call.1} parent=1 // pred_fallthru
      _
    %s29 = sadd.s32 0, 0
    %s30 = smul.u32 48, %s29
    %p31 = scmp.eq.s32.totalorder 0, 0
    // Predicated region
    $region10: #{tpu_custom_call.1} parent=1 // pred_check
      %p32 = pneg %p31
    $region11: #{tpu_custom_call.1} parent=1 // pred_check_branch
      %34 = sbr.rel (%p32) target = $region13
    $region12: #{tpu_custom_call.1} parent=1 // pred_region
      %35 = vst [vmem:[#allocation5] sm:$0xff] 0.0
      %36 = vst [vmem:[#allocation5 + $0x8] sm:$0xff] 0.0
      %37 = vst [vmem:[#allocation5 + $0x10] sm:$0xff] 0.0
      %38 = vst [vmem:[#allocation5 + $0x18] sm:$0xff] 0.0
    $region13: #{tpu_custom_call.1} parent=1 // pred_fallthru
      _
    %v39 = vld [vmem:[#allocation2] sm:$0xff]
    %v40 = vld [vmem:[#allocation2 + $0x8] sm:$0xff]
    %v41 = vld [vmem:[#allocation2 + $0x10] sm:$0xff]
    %v42 = vld [vmem:[#allocation2 + $0x18] sm:$0xff]
    %v43 = vld [vmem:[#allocation2 + $0x20] sm:$0xff]
    %v44 = vld [vmem:[#allocation2 + $0x28] sm:$0xff]
    %v45 = vld [vmem:[#allocation2 + $0x30] sm:$0xff]
    %v46 = vld [vmem:[#allocation2 + $0x38] sm:$0xff]
    %v47 = vld [vmem:[#allocation2 + $0x40] sm:$0xff]
    %v48 = vld [vmem:[#allocation2 + $0x48] sm:$0xff]
    %v49 = vld [vmem:[#allocation2 + $0x50] sm:$0xff]
    %v50 = vld [vmem:[#allocation2 + $0x58] sm:$0xff]
    %v51 = vld [vmem:[#allocation2 + $0x60] sm:$0xff]
    %v52 = vld [vmem:[#allocation2 + $0x68] sm:$0xff]
    %v53 = vld [vmem:[#allocation2 + $0x70] sm:$0xff]
    %v54 = vld [vmem:[#allocation2 + $0x78] sm:$0xff]
    %v55 = vld [vmem:[#allocation2 + $0x80] sm:$0xff]
    %v56 = vld [vmem:[#allocation2 + $0x88] sm:$0xff]
    %v57 = vld [vmem:[#allocation2 + $0x90] sm:$0xff]
    %v58 = vld [vmem:[#allocation2 + $0x98] sm:$0xff]
    %v59 = vld [vmem:[#allocation2 + $0xa0] sm:$0xff]
    %v60 = vld [vmem:[#allocation2 + $0xa8] sm:$0xff]
    %v61 = vld [vmem:[#allocation2 + $0xb0] sm:$0xff]
    %v62 = vld [vmem:[#allocation2 + $0xb8] sm:$0xff]
    %v63 = vld [vmem:[#allocation2 + $0xc0] sm:$0xff]
    %v64 = vld [vmem:[#allocation2 + $0xc8] sm:$0xff]
    %v65 = vld [vmem:[#allocation2 + $0xd0] sm:$0xff]
    %v66 = vld [vmem:[#allocation2 + $0xd8] sm:$0xff]
    %v67 = vld [vmem:[#allocation2 + $0xe0] sm:$0xff]
    %v68 = vld [vmem:[#allocation2 + $0xe8] sm:$0xff]
    %v69 = vld [vmem:[#allocation2 + $0xf0] sm:$0xff]
    %v70 = vld [vmem:[#allocation2 + $0xf8] sm:$0xff]
    %v71 = vld [vmem:[#allocation2 + $0x100] sm:$0xff]
    %v72 = vld [vmem:[#allocation2 + $0x108] sm:$0xff]
    %v73 = vld [vmem:[#allocation2 + $0x110] sm:$0xff]
    %v74 = vld [vmem:[#allocation2 + $0x118] sm:$0xff]
    %v75 = vld [vmem:[#allocation2 + $0x120] sm:$0xff]
    %v76 = vld [vmem:[#allocation2 + $0x128] sm:$0xff]
    %v77 = vld [vmem:[#allocation2 + $0x130] sm:$0xff]
    %v78 = vld [vmem:[#allocation2 + $0x138] sm:$0xff]
    %v79 = vld [vmem:[#allocation2 + $0x140] sm:$0xff]
    %v80 = vld [vmem:[#allocation2 + $0x148] sm:$0xff]
    %v81 = vld [vmem:[#allocation2 + $0x150] sm:$0xff]
    %v82 = vld [vmem:[#allocation2 + $0x158] sm:$0xff]
    %v83 = vld [vmem:[#allocation2 + $0x160] sm:$0xff]
    %v84 = vld [vmem:[#allocation2 + $0x168] sm:$0xff]
    %v85 = vld [vmem:[#allocation2 + $0x170] sm:$0xff]
    %v86 = vld [vmem:[#allocation2 + $0x178] sm:$0xff]
    %v87 = vmax.f32 %v39, 1e-08
    %v88 = vmax.f32 %v40, 1e-08
    %v89 = vmax.f32 %v41, 1e-08
    %v90 = vmax.f32 %v42, 1e-08
    %v91 = vmax.f32 %v43, 1e-08
    %v92 = vmax.f32 %v44, 1e-08
    %v93 = vmax.f32 %v45, 1e-08
    %v94 = vmax.f32 %v46, 1e-08
    %v95 = vmax.f32 %v47, 1e-08
    %v96 = vmax.f32 %v48, 1e-08
    %v97 = vmax.f32 %v49, 1e-08
    %v98 = vmax.f32 %v50, 1e-08
    %v99 = vmax.f32 %v51, 1e-08
    %v100 = vmax.f32 %v52, 1e-08
    %v101 = vmax.f32 %v53, 1e-08
    %v102 = vmax.f32 %v54, 1e-08
    %v103 = vmax.f32 %v55, 1e-08
    %v104 = vmax.f32 %v56, 1e-08
    %v105 = vmax.f32 %v57, 1e-08
    %v106 = vmax.f32 %v58, 1e-08
    %v107 = vmax.f32 %v59, 1e-08
    %v108 = vmax.f32 %v60, 1e-08
    %v109 = vmax.f32 %v61, 1e-08
    %v110 = vmax.f32 %v62, 1e-08
    %v111 = vmax.f32 %v63, 1e-08
    %v112 = vmax.f32 %v64, 1e-08
    %v113 = vmax.f32 %v65, 1e-08
    %v114 = vmax.f32 %v66, 1e-08
    %v115 = vmax.f32 %v67, 1e-08
    %v116 = vmax.f32 %v68, 1e-08
    %v117 = vmax.f32 %v69, 1e-08
    %v118 = vmax.f32 %v70, 1e-08
    %v119 = vmax.f32 %v71, 1e-08
    %v120 = vmax.f32 %v72, 1e-08
    %v121 = vmax.f32 %v73, 1e-08
    %v122 = vmax.f32 %v74, 1e-08
    %v123 = vmax.f32 %v75, 1e-08
    %v124 = vmax.f32 %v76, 1e-08
    %v125 = vmax.f32 %v77, 1e-08
    %v126 = vmax.f32 %v78, 1e-08
    %v127 = vmax.f32 %v79, 1e-08
    %v128 = vmax.f32 %v80, 1e-08
    %v129 = vmax.f32 %v81, 1e-08
    %v130 = vmax.f32 %v82, 1e-08
    %v131 = vmax.f32 %v83, 1e-08
    %v132 = vmax.f32 %v84, 1e-08
    %v133 = vmax.f32 %v85, 1e-08
    %v134 = vmax.f32 %v86, 1e-08
    %v135 = vld [vmem:[#allocation5] sm:$0xff]
    %v136 = vld [vmem:[#allocation5 + $0x8] sm:$0xff]
    %v137 = vld [vmem:[#allocation5 + $0x10] sm:$0xff]
    %v138 = vld [vmem:[#allocation5 + $0x18] sm:$0xff]
    %v139 = vadd.f32 %v87, %v91
    %v140 = vadd.f32 %v139, %v95
    %v141 = vadd.f32 %v140, %v99
    %v142 = vadd.f32 %v141, %v103
    %v143 = vadd.f32 %v142, %v107
    %v144 = vadd.f32 %v143, %v111
    %v145 = vadd.f32 %v144, %v115
    %v146 = vadd.f32 %v145, %v119
    %v147 = vadd.f32 %v146, %v123
    %v148 = vadd.f32 %v147, %v127
    %v149 = vadd.f32 %v148, %v131
    %v150 = vadd.f32 %v88, %v92
    %v151 = vadd.f32 %v150, %v96
    %v152 = vadd.f32 %v151, %v100
    %v153 = vadd.f32 %v152, %v104
    %v154 = vadd.f32 %v153, %v108
    %v155 = vadd.f32 %v154, %v112
    %v156 = vadd.f32 %v155, %v116
    %v157 = vadd.f32 %v156, %v120
    %v158 = vadd.f32 %v157, %v124
    %v159 = vadd.f32 %v158, %v128
    %v160 = vadd.f32 %v159, %v132
    %v161 = vadd.f32 %v89, %v93
    %v162 = vadd.f32 %v161, %v97
    %v163 = vadd.f32 %v162, %v101
    %v164 = vadd.f32 %v163, %v105
    %v165 = vadd.f32 %v164, %v109
    %v166 = vadd.f32 %v165, %v113
    %v167 = vadd.f32 %v166, %v117
    %v168 = vadd.f32 %v167, %v121
    %v169 = vadd.f32 %v168, %v125
    %v170 = vadd.f32 %v169, %v129
    %v171 = vadd.f32 %v170, %v133
    %v172 = vadd.f32 %v90, %v94
    %v173 = vadd.f32 %v172, %v98
    %v174 = vadd.f32 %v173, %v102
    %v175 = vadd.f32 %v174, %v106
    %v176 = vadd.f32 %v175, %v110
    %v177 = vadd.f32 %v176, %v114
    %v178 = vadd.f32 %v177, %v118
    %v179 = vadd.f32 %v178, %v122
    %v180 = vadd.f32 %v179, %v126
    %v181 = vadd.f32 %v180, %v130
    %v182 = vadd.f32 %v181, %v134
    %v183 = vadd.f32 %v135, %v149
    %v184 = vadd.f32 %v136, %v160
    %v185 = vadd.f32 %v137, %v171
    %v186 = vadd.f32 %v138, %v182
    %187 = vst [vmem:[#allocation5] sm:$0xff] %v183
    %188 = vst [vmem:[#allocation5 + $0x8] sm:$0xff] %v184
    %189 = vst [vmem:[#allocation5 + $0x10] sm:$0xff] %v185
    %190 = vst [vmem:[#allocation5 + $0x18] sm:$0xff] %v186
    // Predicated region
    $region14: #{tpu_custom_call.1} parent=1 // pred_check
      _
    $region15: #{tpu_custom_call.1} parent=1 // pred_check_branch
      %192 = sbr.rel (0) target = $region17
    $region16: #{tpu_custom_call.1} parent=1 // pred_region
      %194 = vsyncadd [#allocation4], 0
      %s195 = sshll.u32 [#allocation5], 4
      %s196 = int_to_ptr.vmem [resolvable:$true] %s195
      %s197 = sshll.u32 %s1, 4
      %s198 = int_to_ptr.hbm [resolvable:$true] %s197
      %203 = dma.vmem_to_hbm [thread:$0]  %s196, 512, %s198, [#allocation4], 128, 128, 8
    $region17: #{tpu_custom_call.1} parent=1 // pred_fallthru
      _
    // Predicated region
    $region18: #{tpu_custom_call.1} parent=1 // pred_check
      _
    $region19: #{tpu_custom_call.1} parent=1 // pred_check_branch
      %205 = sbr.rel (0) target = $region21
    $region20: #{tpu_custom_call.1} parent=1 // pred_region
      %207 = dma.done [#allocation4], 512
    $region21: #{tpu_custom_call.1} parent=1 // pred_fallthru
      _
    %208 = vsyncpa [#allocation3], 1
    %209 = vsyncpa [#allocation4], 1

</llo_original>
